<compile_context>
chip_gen: v5e
topology: v5e:2x2
jax: 0.10.0
libtpu: 0.0.40
codegen_flags: <defaults>
</compile_context>

<pallas_src>
import functools

import jax
import jax.numpy as jnp
from jax.experimental import pallas as pl
from jax.experimental.pallas import tpu as pltpu

MARGIN = 10.0
EPS = 1e-6  # F.pairwise_distance default eps


def _contrastive_loss_kernel(*refs, margin, pack):
    if pack > 1:
        seg_ref, diff_ref, out_ref, acc_ref = refs
    else:
        diff_ref, out_ref, acc_ref = refs

    i = pl.program_id(1)  # inner (sequential) axis over edge tiles

    @pl.when(i == 0)
    def _():
        acc_ref[...] = jnp.zeros_like(acc_ref)

    # Block is (tile_r, pack * D): `pack` edges per 128-lane row.
    diff = diff_ref[...].astype(jnp.float32)
    sq = diff * diff                                           # (tile_r, lanes)

    if pack > 1:
        # Segmented per-edge sum via a block-diagonal ones matrix on the
        # otherwise idle MXU; HIGHEST keeps the f32 squares exact.
        sqsum = jnp.dot(sq, seg_ref[...],
                        preferred_element_type=jnp.float32,
                        precision=jax.lax.Precision.HIGHEST)   # (tile_r, pack)
    else:
        sqsum = jnp.sum(sq, axis=-1, keepdims=True)            # (tile_r, 1)

    dist = jnp.sqrt(sqsum)
    losses = jnp.maximum(margin - dist, 0.0)
    # Padded edges were filled so that dist >= margin -> they contribute 0.
    acc_ref[...] += jnp.sum(losses, axis=0, keepdims=True)     # (1, pack)

    @pl.when(i == pl.num_programs(1) - 1)
    def _():
        out_ref[...] = jnp.sum(acc_ref[...], keepdims=True)    # (1, 1) partial


def _num_tensorcores():
    """2 on v7x (2 TCs/chip), else 1. Safe fallback to 1."""
    try:
        dev = jax.devices()[0]
        if dev.platform != "tpu":
            return 1
        kind = dev.device_kind.lower()
        return 2 if ("v7" in kind or "7x" in kind) else 1
    except Exception:
        return 1


def contrastive_loss(embeddings, edge_index, margin=MARGIN,
                     target_block_bytes=4 * 1024 * 1024, num_splits=None):
    """embeddings: (N, D) float; edge_index: (2, E) int32. Returns scalar f32."""
    N, D = embeddings.shape
    E = edge_index.shape[1]

    # Lane packing: how many edges share one 128-lane vreg row.
    pack = (128 // D) if (D < 128 and 128 % D == 0) else 1
    lanes = pack * D
    granule = 8 * pack                     # edges per minimal (8, lanes) tile

    # Edge tile sized by bytes (f32 diff rows), rounded to the granule.
    tile_e_target = max(granule, target_block_bytes // (D * 4))
    want = min(tile_e_target, pl.cdiv(E, granule) * granule)
    tile_e_eff = max(granule, (want // granule) * granule)

    if num_splits is None:
        num_splits = _num_tensorcores()
    if pl.cdiv(E, tile_e_eff) < num_splits:
        num_splits = 1

    chunk = tile_e_eff * num_splits
    e_pad = pl.cdiv(E, chunk) * chunk
    num_tiles = e_pad // tile_e_eff
    tiles_per_split = num_tiles // num_splits
    tile_r = tile_e_eff // pack
    rows = e_pad // pack

    # Glue: data-dependent row gather + subtract stays in XLA; one (E, D) f32
    # array is streamed into the kernel (allow_input_fusion lets XLA fuse the
    # producing fusion into the pallas_call input).
    anchor = jnp.take(embeddings, edge_index[0], axis=0).astype(jnp.float32)
    negative = jnp.take(embeddings, edge_index[1], axis=0).astype(jnp.float32)
    diff = anchor - negative + EPS                        # (E, D)
    if e_pad != E:
        # Padded edges get dist >= margin -> zero loss, no in-kernel mask.
        pad_val = max(abs(float(margin)), 1.0)
        diff = jnp.pad(diff, ((0, e_pad - E), (0, 0)), constant_values=pad_val)
    diff = diff.reshape(rows, lanes)

    kernel = functools.partial(_contrastive_loss_kernel,
                               margin=float(margin), pack=pack)

    inputs = []
    in_specs = []
    if pack > 1:
        # Block-diagonal ones matrix for the segmented sum, built once in XLA
        # and kept resident across grid steps (constant block index).
        lane = jax.lax.broadcasted_iota(jnp.int32, (lanes, pack), 0)
        grp = jax.lax.broadcasted_iota(jnp.int32, (lanes, pack), 1)
        seg = ((lane >= grp * D) & (lane < (grp + 1) * D)).astype(jnp.float32)
        inputs.append(seg)
        in_specs.append(pl.BlockSpec((lanes, pack), lambda c, i: (0, 0)))
    inputs.append(diff)
    in_specs.append(pl.BlockSpec(
        (tile_r, lanes), lambda c, i: (c * tiles_per_split + i, 0)))

    cost = pl.CostEstimate(
        flops=4 * E * D,
        transcendentals=E,                       # one sqrt per edge
        bytes_accessed=e_pad * D * 4 + num_splits * 4)

    partials = pl.pallas_call(
        kernel,
        out_shape=jax.ShapeDtypeStruct((num_splits, 1), jnp.float32),
        grid_spec=pltpu.PrefetchScalarGridSpec(
            num_scalar_prefetch=0,
            grid=(num_splits, tiles_per_split),
            in_specs=in_specs,
            out_specs=pl.BlockSpec((1, 1), lambda c, i: (c, 0)),
            scratch_shapes=[pltpu.VMEM((1, pack), jnp.float32)],
        ),
        compiler_params=pltpu.CompilerParams(
            dimension_semantics=("parallel", "arbitrary"),
            allow_input_fusion=[True] * len(inputs),
            vmem_limit_bytes=32 * 1024 * 1024,   # within v7x scoped budget
        ),
        cost_estimate=cost,
    )(*inputs)

    return jnp.sum(partials) * (1.0 / float(E))


def _reference(embeddings, edge_index, margin=MARGIN):
    a = embeddings[edge_index[0]].astype(jnp.float32)
    n = embeddings[edge_index[1]].astype(jnp.float32)
    dist = jnp.sqrt(jnp.sum((a - n + EPS) ** 2, axis=-1))
    return jnp.mean(jnp.maximum(margin - dist, 0.0))


if __name__ == "__main__":
    key = jax.random.PRNGKey(0)
    k_emb, k_edge = jax.random.split(key)

    N, D, E = 8, 32, 200                    # small synthetic graph
    embeddings = jax.random.normal(k_emb, (N, D), dtype=jnp.float32)
    edge_index = jax.random.randint(k_edge, (2, E), 0, N, dtype=jnp.int32)

    ref = _reference(embeddings, edge_index)

    # Default path (single large tile).
    loss_default = jax.block_until_ready(contrastive_loss(embeddings, edge_index))
    # Forced multi-tile path (padding + cross-step accumulation).
    loss_tiled = jax.block_until_ready(
        contrastive_loss(embeddings, edge_index, target_block_bytes=4096))
    # Forced two-split ("parallel" leading axis) path, as used on v7x.
    loss_split = jax.block_until_ready(
        contrastive_loss(embeddings, edge_index, target_block_bytes=4096,
                         num_splits=2))

    assert jnp.allclose(loss_default, ref, rtol=1e-5, atol=1e-5), (loss_default, ref)
    assert jnp.allclose(loss_tiled, ref, rtol=1e-5, atol=1e-5), (loss_tiled, ref)
    assert jnp.allclose(loss_split, ref, rtol=1e-5, atol=1e-5), (loss_split, ref)

    print("KERNEL_OK")
</pallas_src>

<mosaic_0001>
module attributes {stable_mosaic.version = 11 : i64} {
  func.func @_contrastive_loss_kernel(%arg0: i32, %arg1: i32, %arg2: memref<128x4xf32, #tpu.memory_space<vmem>>, %arg3: memref<56x128xf32, #tpu.memory_space<vmem>>, %arg4: memref<1x1xf32, #tpu.memory_space<vmem>>, %arg5: memref<1x4xf32, #tpu.memory_space<vmem>>) attributes {dimension_semantics = [#tpu.dimension_semantics<parallel>, #tpu.dimension_semantics<arbitrary>], iteration_bounds = array<i64: 1, 1>, scalar_prefetch = 0 : i64, scratch_operands = 1 : i64, tpu.core_type = #tpu.core_type<tc>, window_params = [{pipeline_mode = #tpu.pipeline_mode<synchronous>, transform_indices = @transform_0, window_bounds = array<i64: 128, 4>}, {transform_indices = @transform_1, window_bounds = array<i64: 56, 128>}, {transform_indices = @transform_2, window_bounds = array<i64: 1, 1>}]} {
    %c0_i32 = arith.constant 0 : i32
    %0 = arith.cmpi eq, %arg1, %c0_i32 : i32
    %1 = arith.extui %0 : i1 to i32
    %c0_i32_0 = arith.constant 0 : i32
    %2 = arith.cmpi ne, %1, %c0_i32_0 : i32
    scf.if %2 {
      %cst_13 = arith.constant 0.000000e+00 : f32
      %20 = vector.broadcast %cst_13 : f32 to vector<1x4xf32>
      %c0_14 = arith.constant 0 : index
      %c0_15 = arith.constant 0 : index
      %21 = vector.load %arg5[%c0_14, %c0_15] : memref<1x4xf32, #tpu.memory_space<vmem>>, vector<1x4xf32>
      tpu.vector_store %arg5[%c0_14, %c0_15], %20 {strides = array<i32>} : memref<1x4xf32, #tpu.memory_space<vmem>>, vector<1x4xf32>,
    } else {
    }
    %c0 = arith.constant 0 : index
    %c0_1 = arith.constant 0 : index
    %3 = vector.load %arg3[%c0, %c0_1] : memref<56x128xf32, #tpu.memory_space<vmem>>, vector<56x128xf32>
    %4 = arith.mulf %3, %3 : vector<56x128xf32>
    %c0_2 = arith.constant 0 : index
    %c0_3 = arith.constant 0 : index
    %5 = vector.load %arg2[%c0_2, %c0_3] : memref<128x4xf32, #tpu.memory_space<vmem>>, vector<128x4xf32>
    %cst = arith.constant dense<0.000000e+00> : vector<56x4xf32>
    %6 = tpu.matmul %4, %5, %cst {dimension_numbers = #tpu.dot_dimension_numbers<[1], [0], [0], [1], [0, 0, 1, 1], [], []>, precision = #tpu.contract_precision<fp32>} : vector<56x128xf32>, vector<128x4xf32>, vector<56x4xf32> -> vector<56x4xf32>
    %7 = math.sqrt %6 : vector<56x4xf32>
    %cst_4 = arith.constant 1.000000e+01 : f32
    %8 = vector.broadcast %cst_4 : f32 to vector<56x4xf32>
    %9 = arith.subf %8, %7 : vector<56x4xf32>
    %cst_5 = arith.constant 0.000000e+00 : f32
    %10 = vector.broadcast %cst_5 : f32 to vector<56x4xf32>
    %11 = arith.maximumf %9, %10 : vector<56x4xf32>
    %c0_6 = arith.constant 0 : index
    %c0_7 = arith.constant 0 : index
    %12 = vector.load %arg5[%c0_6, %c0_7] : memref<1x4xf32, #tpu.memory_space<vmem>>, vector<1x4xf32>
    %cst_8 = arith.constant dense<0.000000e+00> : vector<4xf32>
    %13 = vector.multi_reduction <add>, %11, %cst_8 [0] : vector<56x4xf32> to vector<4xf32>
    %14 = vector.shape_cast %13 : vector<4xf32> to vector<1x4xf32>
    %15 = arith.addf %12, %14 : vector<1x4xf32>
    %c0_9 = arith.constant 0 : index
    %c0_10 = arith.constant 0 : index
    %16 = vector.load %arg5[%c0_9, %c0_10] : memref<1x4xf32, #tpu.memory_space<vmem>>, vector<1x4xf32>
    tpu.vector_store %arg5[%c0_9, %c0_10], %15 {strides = array<i32>} : memref<1x4xf32, #tpu.memory_space<vmem>>, vector<1x4xf32>,
    %c0_i32_11 = arith.constant 0 : i32
    %17 = arith.cmpi eq, %arg1, %c0_i32_11 : i32
    %18 = arith.extui %17 : i1 to i32
    %c0_i32_12 = arith.constant 0 : i32
    %19 = arith.cmpi ne, %18, %c0_i32_12 : i32
    scf.if %19 {
      %c0_13 = arith.constant 0 : index
      %c0_14 = arith.constant 0 : index
      %20 = vector.load %arg5[%c0_13, %c0_14] : memref<1x4xf32, #tpu.memory_space<vmem>>, vector<1x4xf32>
      %21 = vector.shape_cast %20 : vector<1x4xf32> to vector<1x1x4xf32>
      %cst_15 = arith.constant dense<0.000000e+00> : vector<1xf32>
      %22 = vector.multi_reduction <add>, %21, %cst_15 [1, 2] : vector<1x1x4xf32> to vector<1xf32>
      %23 = vector.shape_cast %22 : vector<1xf32> to vector<1x1x1xf32>
      %24 = vector.extract %23[0, 0, 0] : f32 from vector<1x1x1xf32>
      %25 = vector.broadcast %24 : f32 to vector<1x1xf32>
      %c0_16 = arith.constant 0 : index
      %c0_17 = arith.constant 0 : index
      %26 = vector.load %arg4[%c0_16, %c0_17] : memref<1x1xf32, #tpu.memory_space<vmem>>, vector<1x1xf32>
      tpu.vector_store %arg4[%c0_16, %c0_17], %25 {strides = array<i32>} : memref<1x1xf32, #tpu.memory_space<vmem>>, vector<1x1xf32>,
    } else {
    }
    return
  }
  func.func @transform_0(%arg0: i32, %arg1: i32) -> (i32, i32) {
    %c0_i32 = arith.constant 0 : i32
    %c0_i32_0 = arith.constant 0 : i32
    %c0_i32_1 = arith.constant 0 : i32
    return %c0_i32, %c0_i32_0 : i32, i32
  }
  func.func @transform_1(%arg0: i32, %arg1: i32) -> (i32, i32) {
    %c1_i32 = arith.constant 1 : i32
    %0 = arith.muli %arg0, %c1_i32 : i32
    %1 = arith.addi %0, %arg1 : i32
    %c0_i32 = arith.constant 0 : i32
    %c0_i32_0 = arith.constant 0 : i32
    return %1, %c0_i32 : i32, i32
  }
  func.func @transform_2(%arg0: i32, %arg1: i32) -> (i32, i32) {
    %c0_i32 = arith.constant 0 : i32
    %c0_i32_0 = arith.constant 0 : i32
    return %arg0, %c0_i32 : i32, i32
  }
}

</mosaic_0001>

<llo_original>
// kernel: tpu_custom_call.1
$region0: #{tpu_custom_call.1}
  #allocation0 [shape = 'u32[]', space=smem, size = 0x4, offset = 0x4, fixed_abs, tag = 'smem constant byte address 0x4 - core index']
  #allocation1 [shape = 'u32[72,128]{1,0:T(1,128)}', space=vmem, size = 0x9000, scoped, tag = 'internal scratch']
  #allocation2 [shape = 'f32[1,4]{1,0:T(1,128)}', space=vmem, size = 0x200, scoped, tag = 'scratch operand']
  %s0 = inlined_call_operand.vmem [shape: f32[128,4], index: 0, kind: input, shape index: {}]
  %s1 = inlined_call_operand.vmem [shape: f32[56,128], index: 1, kind: input, shape index: {}]
  %s2 = inlined_call_operand.hbm [shape: f32[1,1], index: 2, kind: output, shape index: {}]
  %s3 = sld [smem:[#allocation0]]
  $region26: #{tpu_custom_call.1} parent=0
    _
  %s5 = ssub.s32 1, %s3
  %s6 = scalar_select 0, %s5, %s3
  $region1: #{tpu_custom_call.1} parent=0
    #allocation3 [shape = 'u8[512]{0}', space=vmem, size = 0x400, scoped, tag = 'output window, operand 0, single buffered']
    #allocation4 [shape = 's32[1]{0}', space=sflag, size = 0x4, scoped, tag = 'scoped memory for tpu_custom_call.1']
    %7 = vsyncpa [#allocation4], 0
    // Predicated region
    $region2: #{tpu_custom_call.1} parent=1 // pred_check
      _
    $region3: #{tpu_custom_call.1} parent=1 // pred_check_branch
      %9 = sbr.rel (0) target = $region5
    $region4: #{tpu_custom_call.1} parent=1 // pred_region
      _
    $region5: #{tpu_custom_call.1} parent=1 // pred_fallthru
      _
    // Predicated region
    $region6: #{tpu_custom_call.1} parent=1 // pred_check
      _
    $region7: #{tpu_custom_call.1} parent=1 // pred_check_branch
      %11 = sbr.rel (0) target = $region9
    $region8: #{tpu_custom_call.1} parent=1 // pred_region
      %s12 = sadd.s32 0, 0
      %s13 = smul.u32 7, %s12
      %p14 = scmp.lt.s32.totalorder %s13, 6
      %s15 = scalar_select %p14, %s13, 6
      %s16 = smul.addr %s15, 8
      %s17 = scalar_lea.vmem %s1, %s16
      %s18 = sadd.s32 0, 0
      %s19 = smul.u32 7, %s18
    $region9: #{tpu_custom_call.1} parent=1 // pred_fallthru
      _
    %s20 = sadd.s32 0, 0
    %s21 = smul.u32 7, %s20
    %p22 = scmp.lt.s32.totalorder %s21, 6
    %s23 = scalar_select %p22, %s21, 6
    %s24 = smul.addr %s23, 8
    %s25 = scalar_lea.vmem %s1, %s24
    %s26 = sadd.s32 0, 0
    %s27 = smul.u32 7, %s26
    %p28 = scmp.lt.s32.totalorder %s27, 6
    %s29 = scalar_select %p28, %s27, 6
    %s30 = smul.addr %s29, 8
    %s31 = scalar_lea.vmem %s1, %s30
    %s32 = sadd.s32 0, 0
    %s33 = smul.u32 7, %s32
    %p34 = scmp.eq.s32.totalorder 0, 0
    // Predicated region
    $region10: #{tpu_custom_call.1} parent=1 // pred_check
      %p35 = pneg %p34
    $region11: #{tpu_custom_call.1} parent=1 // pred_check_branch
      %37 = sbr.rel (%p35) target = $region13
    $region12: #{tpu_custom_call.1} parent=1 // pred_region
      %vm38 = vcmask 24576
      %39 = vst.msk [vmem:[#allocation2] sm:$0x1] %vm38, 0.0
    $region13: #{tpu_custom_call.1} parent=1 // pred_fallthru
      _
    %v40 = vld [vmem:[%s31] sm:$0xff]
    %v41 = vld [vmem:[%s31 + $0x8] sm:$0xff]
    %v42 = vld [vmem:[%s31 + $0x10] sm:$0xff]
    %v43 = vld [vmem:[%s31 + $0x18] sm:$0xff]
    %v44 = vld [vmem:[%s31 + $0x20] sm:$0xff]
    %v45 = vld [vmem:[%s31 + $0x28] sm:$0xff]
    %v46 = vld [vmem:[%s31 + $0x30] sm:$0xff]
    %v47 = vmul.f32 %v40, %v40
    %v48 = vmul.f32 %v41, %v41
    %v49 = vmul.f32 %v42, %v42
    %v50 = vmul.f32 %v43, %v43
    %v51 = vmul.f32 %v44, %v44
    %v52 = vmul.f32 %v45, %v45
    %v53 = vmul.f32 %v46, %v46
    %v54 = vld [vmem:[%s0] sm:$0xff]
    %v55 = vld [vmem:[%s0 + $0x8] sm:$0xff]
    %v56 = vld [vmem:[%s0 + $0x10] sm:$0xff]
    %v57 = vld [vmem:[%s0 + $0x18] sm:$0xff]
    %v58 = vld [vmem:[%s0 + $0x20] sm:$0xff]
    %v59 = vld [vmem:[%s0 + $0x28] sm:$0xff]
    %v60 = vld [vmem:[%s0 + $0x30] sm:$0xff]
    %v61 = vld [vmem:[%s0 + $0x38] sm:$0xff]
    %v62 = vld [vmem:[%s0 + $0x40] sm:$0xff]
    %v63 = vld [vmem:[%s0 + $0x48] sm:$0xff]
    %v64 = vld [vmem:[%s0 + $0x50] sm:$0xff]
    %v65 = vld [vmem:[%s0 + $0x58] sm:$0xff]
    %v66 = vld [vmem:[%s0 + $0x60] sm:$0xff]
    %v67 = vld [vmem:[%s0 + $0x68] sm:$0xff]
    %v68 = vld [vmem:[%s0 + $0x70] sm:$0xff]
    %v69 = vld [vmem:[%s0 + $0x78] sm:$0xff]
    %v70 = vand.u32 %v69, 4294901760
    %71 = vmatpush.msra.mxu0 %v70
    %v72 = vand.u32 %v68, 4294901760
    %73 = vmatpush.msra.mxu0 %v72
    %v74 = vand.u32 %v67, 4294901760
    %75 = vmatpush.msra.mxu0 %v74
    %v76 = vand.u32 %v66, 4294901760
    %77 = vmatpush.msra.mxu0 %v76
    %v78 = vand.u32 %v65, 4294901760
    %79 = vmatpush.msra.mxu0 %v78
    %v80 = vand.u32 %v64, 4294901760
    %81 = vmatpush.msra.mxu0 %v80
    %v82 = vand.u32 %v63, 4294901760
    %83 = vmatpush.msra.mxu0 %v82
    %v84 = vand.u32 %v62, 4294901760
    %85 = vmatpush.msra.mxu0 %v84
    %v86 = vand.u32 %v61, 4294901760
    %87 = vmatpush.msra.mxu0 %v86
    %v88 = vand.u32 %v60, 4294901760
    %89 = vmatpush.msra.mxu0 %v88
    %v90 = vand.u32 %v59, 4294901760
    %91 = vmatpush.msra.mxu0 %v90
    %v92 = vand.u32 %v58, 4294901760
    %93 = vmatpush.msra.mxu0 %v92
    %v94 = vand.u32 %v57, 4294901760
    %95 = vmatpush.msra.mxu0 %v94
    %v96 = vand.u32 %v56, 4294901760
    %97 = vmatpush.msra.mxu0 %v96
    %v98 = vand.u32 %v55, 4294901760
    %99 = vmatpush.msra.mxu0 %v98
    %v100 = vand.u32 %v54, 4294901760
    %101 = vmatpush.msra.mxu0 %v100
    %v102 = vand.u32 %v47, 4294901760
    %v103 = vsub.f32 %v47, %v102
    %v104 = vand.u32 %v103, 4294901760
    %v105 = vsub.f32 %v103, %v104
    %v106 = vand.u32 %v105, 4294901760
    %107 = vmatmul.f32.gmra.mxu0 %v106
    %v108 = vpop.f32.mrf.mxu0
    %v109 = vadd.f32 0.0, %v108
    %v110 = vand.u32 %v48, 4294901760
    %v111 = vsub.f32 %v48, %v110
    %v112 = vand.u32 %v111, 4294901760
    %v113 = vsub.f32 %v111, %v112
    %v114 = vand.u32 %v113, 4294901760
    %115 = vmatmul.f32.gmra.mxu0 %v114
    %v116 = vpop.f32.mrf.mxu0
    %v117 = vadd.f32 0.0, %v116
    %v118 = vand.u32 %v49, 4294901760
    %v119 = vsub.f32 %v49, %v118
    %v120 = vand.u32 %v119, 4294901760
    %v121 = vsub.f32 %v119, %v120
    %v122 = vand.u32 %v121, 4294901760
    %123 = vmatmul.f32.gmra.mxu0 %v122
    %v124 = vpop.f32.mrf.mxu0
    %v125 = vadd.f32 0.0, %v124
    %v126 = vand.u32 %v50, 4294901760
    %v127 = vsub.f32 %v50, %v126
    %v128 = vand.u32 %v127, 4294901760
    %v129 = vsub.f32 %v127, %v128
    %v130 = vand.u32 %v129, 4294901760
    %131 = vmatmul.f32.gmra.mxu0 %v130
    %v132 = vpop.f32.mrf.mxu0
    %v133 = vadd.f32 0.0, %v132
    %v134 = vand.u32 %v51, 4294901760
    %v135 = vsub.f32 %v51, %v134
    %v136 = vand.u32 %v135, 4294901760
    %v137 = vsub.f32 %v135, %v136
    %v138 = vand.u32 %v137, 4294901760
    %139 = vmatmul.f32.gmra.mxu0 %v138
    %v140 = vpop.f32.mrf.mxu0
    %v141 = vadd.f32 0.0, %v140
    %v142 = vand.u32 %v52, 4294901760
    %v143 = vsub.f32 %v52, %v142
    %v144 = vand.u32 %v143, 4294901760
    %v145 = vsub.f32 %v143, %v144
    %v146 = vand.u32 %v145, 4294901760
    %147 = vmatmul.f32.gmra.mxu0 %v146
    %v148 = vpop.f32.mrf.mxu0
    %v149 = vadd.f32 0.0, %v148
    %v150 = vand.u32 %v53, 4294901760
    %v151 = vsub.f32 %v53, %v150
    %v152 = vand.u32 %v151, 4294901760
    %v153 = vsub.f32 %v151, %v152
    %v154 = vand.u32 %v153, 4294901760
    %155 = vmatmul.f32.gmra.mxu0 %v154
    %v156 = vpop.f32.mrf.mxu0
    %v157 = vadd.f32 0.0, %v156
    %158 = vdwg.mxu0
    %v159 = vand.u32 %v69, 4294901760
    %v160 = vsub.f32 %v69, %v159
    %v161 = vand.u32 %v160, 4294901760
    %v162 = vsub.f32 %v160, %v161
    %v163 = vand.u32 %v162, 4294901760
    %164 = vmatpush.msra.mxu0 %v163
    %v165 = vand.u32 %v68, 4294901760
    %v166 = vsub.f32 %v68, %v165
    %v167 = vand.u32 %v166, 4294901760
    %v168 = vsub.f32 %v166, %v167
    %v169 = vand.u32 %v168, 4294901760
    %170 = vmatpush.msra.mxu0 %v169
    %v171 = vand.u32 %v67, 4294901760
    %v172 = vsub.f32 %v67, %v171
    %v173 = vand.u32 %v172, 4294901760
    %v174 = vsub.f32 %v172, %v173
    %v175 = vand.u32 %v174, 4294901760
    %176 = vmatpush.msra.mxu0 %v175
    %v177 = vand.u32 %v66, 4294901760
    %v178 = vsub.f32 %v66, %v177
    %v179 = vand.u32 %v178, 4294901760
    %v180 = vsub.f32 %v178, %v179
    %v181 = vand.u32 %v180, 4294901760
    %182 = vmatpush.msra.mxu0 %v181
    %v183 = vand.u32 %v65, 4294901760
    %v184 = vsub.f32 %v65, %v183
    %v185 = vand.u32 %v184, 4294901760
    %v186 = vsub.f32 %v184, %v185
    %v187 = vand.u32 %v186, 4294901760
    %188 = vmatpush.msra.mxu0 %v187
    %v189 = vand.u32 %v64, 4294901760
    %v190 = vsub.f32 %v64, %v189
    %v191 = vand.u32 %v190, 4294901760
    %v192 = vsub.f32 %v190, %v191
    %v193 = vand.u32 %v192, 4294901760
    %194 = vmatpush.msra.mxu0 %v193
    %v195 = vand.u32 %v63, 4294901760
    %v196 = vsub.f32 %v63, %v195
    %v197 = vand.u32 %v196, 4294901760
    %v198 = vsub.f32 %v196, %v197
    %v199 = vand.u32 %v198, 4294901760
    %200 = vmatpush.msra.mxu0 %v199
    %v201 = vand.u32 %v62, 4294901760
    %v202 = vsub.f32 %v62, %v201
    %v203 = vand.u32 %v202, 4294901760
    %v204 = vsub.f32 %v202, %v203
    %v205 = vand.u32 %v204, 4294901760
    %206 = vmatpush.msra.mxu0 %v205
    %v207 = vand.u32 %v61, 4294901760
    %v208 = vsub.f32 %v61, %v207
    %v209 = vand.u32 %v208, 4294901760
    %v210 = vsub.f32 %v208, %v209
    %v211 = vand.u32 %v210, 4294901760
    %212 = vmatpush.msra.mxu0 %v211
    %v213 = vand.u32 %v60, 4294901760
    %v214 = vsub.f32 %v60, %v213
    %v215 = vand.u32 %v214, 4294901760
    %v216 = vsub.f32 %v214, %v215
    %v217 = vand.u32 %v216, 4294901760
    %218 = vmatpush.msra.mxu0 %v217
    %v219 = vand.u32 %v59, 4294901760
    %v220 = vsub.f32 %v59, %v219
    %v221 = vand.u32 %v220, 4294901760
    %v222 = vsub.f32 %v220, %v221
    %v223 = vand.u32 %v222, 4294901760
    %224 = vmatpush.msra.mxu0 %v223
    %v225 = vand.u32 %v58, 4294901760
    %v226 = vsub.f32 %v58, %v225
    %v227 = vand.u32 %v226, 4294901760
    %v228 = vsub.f32 %v226, %v227
    %v229 = vand.u32 %v228, 4294901760
    %230 = vmatpush.msra.mxu0 %v229
    %v231 = vand.u32 %v57, 4294901760
    %v232 = vsub.f32 %v57, %v231
    %v233 = vand.u32 %v232, 4294901760
    %v234 = vsub.f32 %v232, %v233
    %v235 = vand.u32 %v234, 4294901760
    %236 = vmatpush.msra.mxu0 %v235
    %v237 = vand.u32 %v56, 4294901760
    %v238 = vsub.f32 %v56, %v237
    %v239 = vand.u32 %v238, 4294901760
    %v240 = vsub.f32 %v238, %v239
    %v241 = vand.u32 %v240, 4294901760
    %242 = vmatpush.msra.mxu0 %v241
    %v243 = vand.u32 %v55, 4294901760
    %v244 = vsub.f32 %v55, %v243
    %v245 = vand.u32 %v244, 4294901760
    %v246 = vsub.f32 %v244, %v245
    %v247 = vand.u32 %v246, 4294901760
    %248 = vmatpush.msra.mxu0 %v247
    %v249 = vand.u32 %v54, 4294901760
    %v250 = vsub.f32 %v54, %v249
    %v251 = vand.u32 %v250, 4294901760
    %v252 = vsub.f32 %v250, %v251
    %v253 = vand.u32 %v252, 4294901760
    %254 = vmatpush.msra.mxu0 %v253
    %v255 = vand.u32 %v47, 4294901760
    %256 = vmatmul.f32.gmra.mxu0 %v255
    %v257 = vpop.f32.mrf.mxu0
    %v258 = vadd.f32 %v109, %v257
    %v259 = vand.u32 %v48, 4294901760
    %260 = vmatmul.f32.gmra.mxu0 %v259
    %v261 = vpop.f32.mrf.mxu0
    %v262 = vadd.f32 %v117, %v261
    %v263 = vand.u32 %v49, 4294901760
    %264 = vmatmul.f32.gmra.mxu0 %v263
    %v265 = vpop.f32.mrf.mxu0
    %v266 = vadd.f32 %v125, %v265
    %v267 = vand.u32 %v50, 4294901760
    %268 = vmatmul.f32.gmra.mxu0 %v267
    %v269 = vpop.f32.mrf.mxu0
    %v270 = vadd.f32 %v133, %v269
    %v271 = vand.u32 %v51, 4294901760
    %272 = vmatmul.f32.gmra.mxu0 %v271
    %v273 = vpop.f32.mrf.mxu0
    %v274 = vadd.f32 %v141, %v273
    %v275 = vand.u32 %v52, 4294901760
    %276 = vmatmul.f32.gmra.mxu0 %v275
    %v277 = vpop.f32.mrf.mxu0
    %v278 = vadd.f32 %v149, %v277
    %v279 = vand.u32 %v53, 4294901760
    %280 = vmatmul.f32.gmra.mxu0 %v279
    %v281 = vpop.f32.mrf.mxu0
    %v282 = vadd.f32 %v157, %v281
    %283 = vdwg.mxu0
    %v284 = vand.u32 %v69, 4294901760
    %v285 = vsub.f32 %v69, %v284
    %286 = vmatpush.msra.mxu0 %v285
    %v287 = vand.u32 %v68, 4294901760
    %v288 = vsub.f32 %v68, %v287
    %289 = vmatpush.msra.mxu0 %v288
    %v290 = vand.u32 %v67, 4294901760
    %v291 = vsub.f32 %v67, %v290
    %292 = vmatpush.msra.mxu0 %v291
    %v293 = vand.u32 %v66, 4294901760
    %v294 = vsub.f32 %v66, %v293
    %295 = vmatpush.msra.mxu0 %v294
    %v296 = vand.u32 %v65, 4294901760
    %v297 = vsub.f32 %v65, %v296
    %298 = vmatpush.msra.mxu0 %v297
    %v299 = vand.u32 %v64, 4294901760
    %v300 = vsub.f32 %v64, %v299
    %301 = vmatpush.msra.mxu0 %v300
    %v302 = vand.u32 %v63, 4294901760
    %v303 = vsub.f32 %v63, %v302
    %304 = vmatpush.msra.mxu0 %v303
    %v305 = vand.u32 %v62, 4294901760
    %v306 = vsub.f32 %v62, %v305
    %307 = vmatpush.msra.mxu0 %v306
    %v308 = vand.u32 %v61, 4294901760
    %v309 = vsub.f32 %v61, %v308
    %310 = vmatpush.msra.mxu0 %v309
    %v311 = vand.u32 %v60, 4294901760
    %v312 = vsub.f32 %v60, %v311
    %313 = vmatpush.msra.mxu0 %v312
    %v314 = vand.u32 %v59, 4294901760
    %v315 = vsub.f32 %v59, %v314
    %316 = vmatpush.msra.mxu0 %v315
    %v317 = vand.u32 %v58, 4294901760
    %v318 = vsub.f32 %v58, %v317
    %319 = vmatpush.msra.mxu0 %v318
    %v320 = vand.u32 %v57, 4294901760
    %v321 = vsub.f32 %v57, %v320
    %322 = vmatpush.msra.mxu0 %v321
    %v323 = vand.u32 %v56, 4294901760
    %v324 = vsub.f32 %v56, %v323
    %325 = vmatpush.msra.mxu0 %v324
    %v326 = vand.u32 %v55, 4294901760
    %v327 = vsub.f32 %v55, %v326
    %328 = vmatpush.msra.mxu0 %v327
    %v329 = vand.u32 %v54, 4294901760
    %v330 = vsub.f32 %v54, %v329
    %331 = vmatpush.msra.mxu0 %v330
    %v332 = vand.u32 %v47, 4294901760
    %v333 = vsub.f32 %v47, %v332
    %334 = vmatmul.f32.gmra.mxu0 %v333
    %v335 = vpop.f32.mrf.mxu0
    %v336 = vadd.f32 %v258, %v335
    %v337 = vand.u32 %v48, 4294901760
    %v338 = vsub.f32 %v48, %v337
    %339 = vmatmul.f32.gmra.mxu0 %v338
    %v340 = vpop.f32.mrf.mxu0
    %v341 = vadd.f32 %v262, %v340
    %v342 = vand.u32 %v49, 4294901760
    %v343 = vsub.f32 %v49, %v342
    %344 = vmatmul.f32.gmra.mxu0 %v343
    %v345 = vpop.f32.mrf.mxu0
    %v346 = vadd.f32 %v266, %v345
    %v347 = vand.u32 %v50, 4294901760
    %v348 = vsub.f32 %v50, %v347
    %349 = vmatmul.f32.gmra.mxu0 %v348
    %v350 = vpop.f32.mrf.mxu0
    %v351 = vadd.f32 %v270, %v350
    %v352 = vand.u32 %v51, 4294901760
    %v353 = vsub.f32 %v51, %v352
    %354 = vmatmul.f32.gmra.mxu0 %v353
    %v355 = vpop.f32.mrf.mxu0
    %v356 = vadd.f32 %v274, %v355
    %v357 = vand.u32 %v52, 4294901760
    %v358 = vsub.f32 %v52, %v357
    %359 = vmatmul.f32.gmra.mxu0 %v358
    %v360 = vpop.f32.mrf.mxu0
    %v361 = vadd.f32 %v278, %v360
    %v362 = vand.u32 %v53, 4294901760
    %v363 = vsub.f32 %v53, %v362
    %364 = vmatmul.f32.gmra.mxu0 %v363
    %v365 = vpop.f32.mrf.mxu0
    %v366 = vadd.f32 %v282, %v365
    %367 = vdwg.mxu0
    %v368 = vand.u32 %v69, 4294901760
    %369 = vmatpush.msra.mxu0 %v368
    %v370 = vand.u32 %v68, 4294901760
    %371 = vmatpush.msra.mxu0 %v370
    %v372 = vand.u32 %v67, 4294901760
    %373 = vmatpush.msra.mxu0 %v372
    %v374 = vand.u32 %v66, 4294901760
    %375 = vmatpush.msra.mxu0 %v374
    %v376 = vand.u32 %v65, 4294901760
    %377 = vmatpush.msra.mxu0 %v376
    %v378 = vand.u32 %v64, 4294901760
    %379 = vmatpush.msra.mxu0 %v378
    %v380 = vand.u32 %v63, 4294901760
    %381 = vmatpush.msra.mxu0 %v380
    %v382 = vand.u32 %v62, 4294901760
    %383 = vmatpush.msra.mxu0 %v382
    %v384 = vand.u32 %v61, 4294901760
    %385 = vmatpush.msra.mxu0 %v384
    %v386 = vand.u32 %v60, 4294901760
    %387 = vmatpush.msra.mxu0 %v386
    %v388 = vand.u32 %v59, 4294901760
    %389 = vmatpush.msra.mxu0 %v388
    %v390 = vand.u32 %v58, 4294901760
    %391 = vmatpush.msra.mxu0 %v390
    %v392 = vand.u32 %v57, 4294901760
    %393 = vmatpush.msra.mxu0 %v392
    %v394 = vand.u32 %v56, 4294901760
    %395 = vmatpush.msra.mxu0 %v394
    %v396 = vand.u32 %v55, 4294901760
    %397 = vmatpush.msra.mxu0 %v396
    %v398 = vand.u32 %v54, 4294901760
    %399 = vmatpush.msra.mxu0 %v398
    %v400 = vand.u32 %v47, 4294901760
    %v401 = vsub.f32 %v47, %v400
    %v402 = vand.u32 %v401, 4294901760
    %403 = vmatmul.f32.gmra.mxu0 %v402
    %v404 = vpop.f32.mrf.mxu0
    %v405 = vadd.f32 %v336, %v404
    %v406 = vand.u32 %v48, 4294901760
    %v407 = vsub.f32 %v48, %v406
    %v408 = vand.u32 %v407, 4294901760
    %409 = vmatmul.f32.gmra.mxu0 %v408
    %v410 = vpop.f32.mrf.mxu0
    %v411 = vadd.f32 %v341, %v410
    %v412 = vand.u32 %v49, 4294901760
    %v413 = vsub.f32 %v49, %v412
    %v414 = vand.u32 %v413, 4294901760
    %415 = vmatmul.f32.gmra.mxu0 %v414
    %v416 = vpop.f32.mrf.mxu0
    %v417 = vadd.f32 %v346, %v416
    %v418 = vand.u32 %v50, 4294901760
    %v419 = vsub.f32 %v50, %v418
    %v420 = vand.u32 %v419, 4294901760
    %421 = vmatmul.f32.gmra.mxu0 %v420
    %v422 = vpop.f32.mrf.mxu0
    %v423 = vadd.f32 %v351, %v422
    %v424 = vand.u32 %v51, 4294901760
    %v425 = vsub.f32 %v51, %v424
    %v426 = vand.u32 %v425, 4294901760
    %427 = vmatmul.f32.gmra.mxu0 %v426
    %v428 = vpop.f32.mrf.mxu0
    %v429 = vadd.f32 %v356, %v428
    %v430 = vand.u32 %v52, 4294901760
    %v431 = vsub.f32 %v52, %v430
    %v432 = vand.u32 %v431, 4294901760
    %433 = vmatmul.f32.gmra.mxu0 %v432
    %v434 = vpop.f32.mrf.mxu0
    %v435 = vadd.f32 %v361, %v434
    %v436 = vand.u32 %v53, 4294901760
    %v437 = vsub.f32 %v53, %v436
    %v438 = vand.u32 %v437, 4294901760
    %439 = vmatmul.f32.gmra.mxu0 %v438
    %v440 = vpop.f32.mrf.mxu0
    %v441 = vadd.f32 %v366, %v440
    %442 = vdwg.mxu0
    %v443 = vand.u32 %v69, 4294901760
    %v444 = vsub.f32 %v69, %v443
    %v445 = vand.u32 %v444, 4294901760
    %446 = vmatpush.msra.mxu0 %v445
    %v447 = vand.u32 %v68, 4294901760
    %v448 = vsub.f32 %v68, %v447
    %v449 = vand.u32 %v448, 4294901760
    %450 = vmatpush.msra.mxu0 %v449
    %v451 = vand.u32 %v67, 4294901760
    %v452 = vsub.f32 %v67, %v451
    %v453 = vand.u32 %v452, 4294901760
    %454 = vmatpush.msra.mxu0 %v453
    %v455 = vand.u32 %v66, 4294901760
    %v456 = vsub.f32 %v66, %v455
    %v457 = vand.u32 %v456, 4294901760
    %458 = vmatpush.msra.mxu0 %v457
    %v459 = vand.u32 %v65, 4294901760
    %v460 = vsub.f32 %v65, %v459
    %v461 = vand.u32 %v460, 4294901760
    %462 = vmatpush.msra.mxu0 %v461
    %v463 = vand.u32 %v64, 4294901760
    %v464 = vsub.f32 %v64, %v463
    %v465 = vand.u32 %v464, 4294901760
    %466 = vmatpush.msra.mxu0 %v465
    %v467 = vand.u32 %v63, 4294901760
    %v468 = vsub.f32 %v63, %v467
    %v469 = vand.u32 %v468, 4294901760
    %470 = vmatpush.msra.mxu0 %v469
    %v471 = vand.u32 %v62, 4294901760
    %v472 = vsub.f32 %v62, %v471
    %v473 = vand.u32 %v472, 4294901760
    %474 = vmatpush.msra.mxu0 %v473
    %v475 = vand.u32 %v61, 4294901760
    %v476 = vsub.f32 %v61, %v475
    %v477 = vand.u32 %v476, 4294901760
    %478 = vmatpush.msra.mxu0 %v477
    %v479 = vand.u32 %v60, 4294901760
    %v480 = vsub.f32 %v60, %v479
    %v481 = vand.u32 %v480, 4294901760
    %482 = vmatpush.msra.mxu0 %v481
    %v483 = vand.u32 %v59, 4294901760
    %v484 = vsub.f32 %v59, %v483
    %v485 = vand.u32 %v484, 4294901760
    %486 = vmatpush.msra.mxu0 %v485
    %v487 = vand.u32 %v58, 4294901760
    %v488 = vsub.f32 %v58, %v487
    %v489 = vand.u32 %v488, 4294901760
    %490 = vmatpush.msra.mxu0 %v489
    %v491 = vand.u32 %v57, 4294901760
    %v492 = vsub.f32 %v57, %v491
    %v493 = vand.u32 %v492, 4294901760
    %494 = vmatpush.msra.mxu0 %v493
    %v495 = vand.u32 %v56, 4294901760
    %v496 = vsub.f32 %v56, %v495
    %v497 = vand.u32 %v496, 4294901760
    %498 = vmatpush.msra.mxu0 %v497
    %v499 = vand.u32 %v55, 4294901760
    %v500 = vsub.f32 %v55, %v499
    %v501 = vand.u32 %v500, 4294901760
    %502 = vmatpush.msra.mxu0 %v501
    %v503 = vand.u32 %v54, 4294901760
    %v504 = vsub.f32 %v54, %v503
    %v505 = vand.u32 %v504, 4294901760
    %506 = vmatpush.msra.mxu0 %v505
    %v507 = vand.u32 %v47, 4294901760
    %508 = vmatmul.f32.gmra.mxu0 %v507
    %v509 = vpop.f32.mrf.mxu0
    %v510 = vadd.f32 %v405, %v509
    %v511 = vand.u32 %v48, 4294901760
    %512 = vmatmul.f32.gmra.mxu0 %v511
    %v513 = vpop.f32.mrf.mxu0
    %v514 = vadd.f32 %v411, %v513
    %v515 = vand.u32 %v49, 4294901760
    %516 = vmatmul.f32.gmra.mxu0 %v515
    %v517 = vpop.f32.mrf.mxu0
    %v518 = vadd.f32 %v417, %v517
    %v519 = vand.u32 %v50, 4294901760
    %520 = vmatmul.f32.gmra.mxu0 %v519
    %v521 = vpop.f32.mrf.mxu0
    %v522 = vadd.f32 %v423, %v521
    %v523 = vand.u32 %v51, 4294901760
    %524 = vmatmul.f32.gmra.mxu0 %v523
    %v525 = vpop.f32.mrf.mxu0
    %v526 = vadd.f32 %v429, %v525
    %v527 = vand.u32 %v52, 4294901760
    %528 = vmatmul.f32.gmra.mxu0 %v527
    %v529 = vpop.f32.mrf.mxu0
    %v530 = vadd.f32 %v435, %v529
    %v531 = vand.u32 %v53, 4294901760
    %532 = vmatmul.f32.gmra.mxu0 %v531
    %v533 = vpop.f32.mrf.mxu0
    %v534 = vadd.f32 %v441, %v533
    %535 = vdwg.mxu0
    %v536 = vand.u32 %v69, 4294901760
    %537 = vmatpush.msra.mxu0 %v536
    %v538 = vand.u32 %v68, 4294901760
    %539 = vmatpush.msra.mxu0 %v538
    %v540 = vand.u32 %v67, 4294901760
    %541 = vmatpush.msra.mxu0 %v540
    %v542 = vand.u32 %v66, 4294901760
    %543 = vmatpush.msra.mxu0 %v542
    %v544 = vand.u32 %v65, 4294901760
    %545 = vmatpush.msra.mxu0 %v544
    %v546 = vand.u32 %v64, 4294901760
    %547 = vmatpush.msra.mxu0 %v546
    %v548 = vand.u32 %v63, 4294901760
    %549 = vmatpush.msra.mxu0 %v548
    %v550 = vand.u32 %v62, 4294901760
    %551 = vmatpush.msra.mxu0 %v550
    %v552 = vand.u32 %v61, 4294901760
    %553 = vmatpush.msra.mxu0 %v552
    %v554 = vand.u32 %v60, 4294901760
    %555 = vmatpush.msra.mxu0 %v554
    %v556 = vand.u32 %v59, 4294901760
    %557 = vmatpush.msra.mxu0 %v556
    %v558 = vand.u32 %v58, 4294901760
    %559 = vmatpush.msra.mxu0 %v558
    %v560 = vand.u32 %v57, 4294901760
    %561 = vmatpush.msra.mxu0 %v560
    %v562 = vand.u32 %v56, 4294901760
    %563 = vmatpush.msra.mxu0 %v562
    %v564 = vand.u32 %v55, 4294901760
    %565 = vmatpush.msra.mxu0 %v564
    %v566 = vand.u32 %v54, 4294901760
    %567 = vmatpush.msra.mxu0 %v566
    %v568 = vand.u32 %v47, 4294901760
    %569 = vmatmul.f32.gmra.mxu0 %v568
    %v570 = vpop.f32.mrf.mxu0
    %v571 = vadd.f32 %v510, %v570
    %v572 = vand.u32 %v48, 4294901760
    %573 = vmatmul.f32.gmra.mxu0 %v572
    %v574 = vpop.f32.mrf.mxu0
    %v575 = vadd.f32 %v514, %v574
    %v576 = vand.u32 %v49, 4294901760
    %577 = vmatmul.f32.gmra.mxu0 %v576
    %v578 = vpop.f32.mrf.mxu0
    %v579 = vadd.f32 %v518, %v578
    %v580 = vand.u32 %v50, 4294901760
    %581 = vmatmul.f32.gmra.mxu0 %v580
    %v582 = vpop.f32.mrf.mxu0
    %v583 = vadd.f32 %v522, %v582
    %v584 = vand.u32 %v51, 4294901760
    %585 = vmatmul.f32.gmra.mxu0 %v584
    %v586 = vpop.f32.mrf.mxu0
    %v587 = vadd.f32 %v526, %v586
    %v588 = vand.u32 %v52, 4294901760
    %589 = vmatmul.f32.gmra.mxu0 %v588
    %v590 = vpop.f32.mrf.mxu0
    %v591 = vadd.f32 %v530, %v590
    %v592 = vand.u32 %v53, 4294901760
    %593 = vmatmul.f32.gmra.mxu0 %v592
    %v594 = vpop.f32.mrf.mxu0
    %v595 = vadd.f32 %v534, %v594
    %596 = vdwg.mxu0
    %v597 = vrsqrt.pop %v571
    %v598 = vmul.f32 %v597, %v571
    %v599 = vmul.f32 %v598, %v597
    %v600 = vmul.f32 0.5, %v599
    %v601 = vsub.f32 1.5, %v600
    %v602 = vmul.f32 %v597, %v601
    %v603 = vmul.f32 %v571, %v602
    %vm604 = vcmp.eq.f32.partialorder %v571, inf
    %v605 = vsel %vm604, %v571, %v603
    %vm606 = vcmp.eq.f32.partialorder %v571, 0.0
    %v607 = vand.u32 %v571, 2147483648
    %v608 = vsel %vm606, %v607, %v605
    %v609 = vrsqrt.pop %v575
    %v610 = vmul.f32 %v609, %v575
    %v611 = vmul.f32 %v610, %v609
    %v612 = vmul.f32 0.5, %v611
    %v613 = vsub.f32 1.5, %v612
    %v614 = vmul.f32 %v609, %v613
    %v615 = vmul.f32 %v575, %v614
    %vm616 = vcmp.eq.f32.partialorder %v575, inf
    %v617 = vsel %vm616, %v575, %v615
    %vm618 = vcmp.eq.f32.partialorder %v575, 0.0
    %v619 = vand.u32 %v575, 2147483648
    %v620 = vsel %vm618, %v619, %v617
    %v621 = vrsqrt.pop %v579
    %v622 = vmul.f32 %v621, %v579
    %v623 = vmul.f32 %v622, %v621
    %v624 = vmul.f32 0.5, %v623
    %v625 = vsub.f32 1.5, %v624
    %v626 = vmul.f32 %v621, %v625
    %v627 = vmul.f32 %v579, %v626
    %vm628 = vcmp.eq.f32.partialorder %v579, inf
    %v629 = vsel %vm628, %v579, %v627
    %vm630 = vcmp.eq.f32.partialorder %v579, 0.0
    %v631 = vand.u32 %v579, 2147483648
    %v632 = vsel %vm630, %v631, %v629
    %v633 = vrsqrt.pop %v583
    %v634 = vmul.f32 %v633, %v583
    %v635 = vmul.f32 %v634, %v633
    %v636 = vmul.f32 0.5, %v635
    %v637 = vsub.f32 1.5, %v636
    %v638 = vmul.f32 %v633, %v637
    %v639 = vmul.f32 %v583, %v638
    %vm640 = vcmp.eq.f32.partialorder %v583, inf
    %v641 = vsel %vm640, %v583, %v639
    %vm642 = vcmp.eq.f32.partialorder %v583, 0.0
    %v643 = vand.u32 %v583, 2147483648
    %v644 = vsel %vm642, %v643, %v641
    %v645 = vrsqrt.pop %v587
    %v646 = vmul.f32 %v645, %v587
    %v647 = vmul.f32 %v646, %v645
    %v648 = vmul.f32 0.5, %v647
    %v649 = vsub.f32 1.5, %v648
    %v650 = vmul.f32 %v645, %v649
    %v651 = vmul.f32 %v587, %v650
    %vm652 = vcmp.eq.f32.partialorder %v587, inf
    %v653 = vsel %vm652, %v587, %v651
    %vm654 = vcmp.eq.f32.partialorder %v587, 0.0
    %v655 = vand.u32 %v587, 2147483648
    %v656 = vsel %vm654, %v655, %v653
    %v657 = vrsqrt.pop %v591
    %v658 = vmul.f32 %v657, %v591
    %v659 = vmul.f32 %v658, %v657
    %v660 = vmul.f32 0.5, %v659
    %v661 = vsub.f32 1.5, %v660
    %v662 = vmul.f32 %v657, %v661
    %v663 = vmul.f32 %v591, %v662
    %vm664 = vcmp.eq.f32.partialorder %v591, inf
    %v665 = vsel %vm664, %v591, %v663
    %vm666 = vcmp.eq.f32.partialorder %v591, 0.0
    %v667 = vand.u32 %v591, 2147483648
    %v668 = vsel %vm666, %v667, %v665
    %v669 = vrsqrt.pop %v595
    %v670 = vmul.f32 %v669, %v595
    %v671 = vmul.f32 %v670, %v669
    %v672 = vmul.f32 0.5, %v671
    %v673 = vsub.f32 1.5, %v672
    %v674 = vmul.f32 %v669, %v673
    %v675 = vmul.f32 %v595, %v674
    %vm676 = vcmp.eq.f32.partialorder %v595, inf
    %v677 = vsel %vm676, %v595, %v675
    %vm678 = vcmp.eq.f32.partialorder %v595, 0.0
    %v679 = vand.u32 %v595, 2147483648
    %v680 = vsel %vm678, %v679, %v677
    %v681 = vsub.f32 10.0, %v608
    %v682 = vsub.f32 10.0, %v620
    %v683 = vsub.f32 10.0, %v632
    %v684 = vsub.f32 10.0, %v644
    %v685 = vsub.f32 10.0, %v656
    %v686 = vsub.f32 10.0, %v668
    %v687 = vsub.f32 10.0, %v680
    %v688 = vmax.f32 %v681, 0.0
    %v689 = vmax.f32 %v682, 0.0
    %v690 = vmax.f32 %v683, 0.0
    %v691 = vmax.f32 %v684, 0.0
    %v692 = vmax.f32 %v685, 0.0
    %v693 = vmax.f32 %v686, 0.0
    %v694 = vmax.f32 %v687, 0.0
    %v695 = vld [vmem:[#allocation2] sm:$0x1]
    %vm696 = vcmask 31744
    %v697 = vsel %vm696, %v688, 0.0
    %v698 = vsel %vm696, %v689, 0.0
    %v699 = vadd.f32 %v697, %v698
    %v700 = vsel %vm696, %v690, 0.0
    %v701 = vadd.f32 %v699, %v700
    %v702 = vsel %vm696, %v691, 0.0
    %v703 = vadd.f32 %v701, %v702
    %v704 = vsel %vm696, %v692, 0.0
    %v705 = vadd.f32 %v703, %v704
    %v706 = vsel %vm696, %v693, 0.0
    %v707 = vadd.f32 %v705, %v706
    %v708 = vsel %vm696, %v694, 0.0
    %v709 = vadd.f32 %v707, %v708
    %v710 = vrot.slane %v709, 4
    %v711 = vadd.f32 %v709, %v710
    %v712 = vrot.slane %v711, 2
    %v713 = vadd.f32 %v711, %v712
    %v714 = vrot.slane %v713, 1
    %v715 = vadd.f32 %v713, %v714
    %v716 = vadd.f32 %v695, %v715
    %vm717 = vcmask 24576
    %718 = vst.msk [vmem:[#allocation2] sm:$0x1] %vm717, %v716
    // Predicated region
    $region14: #{tpu_custom_call.1} parent=1 // pred_check
      %p719 = pneg %p34
    $region15: #{tpu_custom_call.1} parent=1 // pred_check_branch
      %721 = sbr.rel (%p719) target = $region17
    $region16: #{tpu_custom_call.1} parent=1 // pred_region
      %v722 = vld [vmem:[#allocation2] sm:$0x1]
      %v723 = vsel %vm717, %v722, 0.0
      %724 = vadd.xlane.f32.xlu0 %v723
      %v725 = vpop.xlane.xlu0 %724
      %v726 = vrot.slane %v725, 4
      %v727 = vadd.f32 %v725, %v726
      %v728 = vrot.slane %v727, 2
      %v729 = vadd.f32 %v727, %v728
      %v730 = vrot.slane %v729, 1
      %v731 = vadd.f32 %v729, %v730
      %s732 = vtos %v731
      %v733 = vstv %s732
      %vm734 = vcmask 0
      %735 = vst.msk [vmem:[#allocation3] sm:$0x1] %vm734, %v733
    $region17: #{tpu_custom_call.1} parent=1 // pred_fallthru
      _
    // Predicated region
    $region18: #{tpu_custom_call.1} parent=1 // pred_check
      _
    $region19: #{tpu_custom_call.1} parent=1 // pred_check_branch
      %737 = sbr.rel (0) target = $region21
    $region20: #{tpu_custom_call.1} parent=1 // pred_region
      %739 = vsyncadd [#allocation4], 0
      %s741 = sshll.u32 [#allocation3], 4
      %s742 = int_to_ptr.vmem [resolvable:$true] %s741
      %s743 = sshll.u32 %s2, 4
      %s744 = int_to_ptr.hbm [resolvable:$true] %s743
      %746 = dma.vmem_to_hbm [thread:$0]  %s742, 16, %s744, [#allocation4]
    $region21: #{tpu_custom_call.1} parent=1 // pred_fallthru
      _
    // Predicated region
    $region22: #{tpu_custom_call.1} parent=1 // pred_check
      _
    $region23: #{tpu_custom_call.1} parent=1 // pred_check_branch
      %748 = sbr.rel (0) target = $region25
    $region24: #{tpu_custom_call.1} parent=1 // pred_region
      %750 = dma.done [#allocation4], 16
    $region25: #{tpu_custom_call.1} parent=1 // pred_fallthru
      _
    %751 = vsyncpa [#allocation4], 1

</llo_original>
